<compile_context>
chip_gen: v6e
topology: v6e:2x2x1
jax: 0.10.0
libtpu: 0.0.40
codegen_flags: <defaults>
</compile_context>

<pallas_src>
import functools

import numpy as np
import jax
import jax.numpy as jnp
from jax import lax
from jax.experimental import pallas as pl
from jax.experimental.pallas import tpu as pltpu

EPS = 1e-5
LANE = 128
TARGET_BLOCK_BYTES = 2 << 20      # ~2 MiB of activations per block (review: 1-4 MiB)


def _round_up(x, m):
    return (x + m - 1) // m * m


def _plan(BC, HW, dtype):
    """Pick (row_tile, params_resident, vmem_limit_bytes) for this shape/dtype/chip."""
    isz = jnp.dtype(dtype).itemsize
    # Sublane granularity of the native tiling: 8 for 4-byte, 16 for 2-byte, 32 for 1-byte.
    row_align = max(8, 32 // max(isz, 1))
    lane_pad = _round_up(max(HW, 1), LANE)          # physical lanes per row in VMEM

    try:
        vmem_cap = int(pltpu.get_tpu_info().vmem_capacity_bytes)
    except Exception:                               # no query available -> be conservative
        vmem_cap = 64 << 20                         # v7x per-TensorCore VMEM

    # Per-row VMEM pressure: double-buffered input + output blocks plus the
    # in-kernel f32 working copies (x_f32 and the centered residual d).
    per_row = lane_pad * (2 * isz + 2 * isz + 2 * 4)
    budget = min(vmem_cap // 3, 48 << 20)

    if BC < row_align:
        # Tiny channel count: a single full-extent block (block dim == array dim
        # is exempt from the sublane-multiple rule); stream the (BC, 1) params.
        rows = BC
        params_resident = False
    else:
        rows = TARGET_BLOCK_BYTES // (lane_pad * isz)
        rows = min(rows, max(budget // per_row, 1), _round_up(BC, row_align))
        rows = max(row_align, rows // row_align * row_align)
        # TODO(synk): for huge HW (one aligned row tile already over budget) split the
        # lane axis inside a grid step with pltpu.emit_pipeline instead of shrinking rows.
        if pl.cdiv(BC, rows) < 2 and BC > row_align:
            # Keep >= 2 grid steps so ("parallel",) can use both v7x TensorCores.
            rows = max(row_align, _round_up(pl.cdiv(BC, 2), row_align))
        bcp = pl.cdiv(BC, rows) * rows
        params_resident = 2 * _round_up(bcp, 8) * LANE * 4 <= (2 << 20)

    bcp = pl.cdiv(BC, rows) * rows
    param_bytes = (2 * _round_up(bcp, 8) * LANE * 4 if params_resident
                   else 4 * _round_up(rows, 8) * LANE * 4)
    needed = rows * per_row + param_bytes + (2 << 20)
    vmem_limit = int(min(max(2 * needed, 32 << 20), max(vmem_cap * 9 // 10, 32 << 20)))
    return rows, params_resident, vmem_limit


def adain_kernel(x_ref, w_ref, b_ref, o_ref, *, row_tile, eps, params_resident):
    """One tile: (row_tile, HW) activations (native dtype), per-row gamma/beta."""
    x = x_ref[...].astype(jnp.float32)                     # f32 math in-vreg only
    inv_n = jnp.float32(1.0 / x.shape[1])

    mean = jnp.sum(x, axis=1, keepdims=True) * inv_n       # (TR, 1)
    d = x - mean                                            # two-pass, no lane mask needed:
    var = jnp.sum(d * d, axis=1, keepdims=True) * inv_n    # lane block == full HW extent
    inv_std = lax.rsqrt(var + jnp.float32(eps))            # EUP

    if params_resident:
        # gamma/beta live in VMEM for the whole grid; slice this tile's rows.
        r0 = pl.multiple_of(pl.program_id(0) * row_tile, row_tile)
        gamma = w_ref[pl.ds(r0, row_tile), :]               # (TR, 1)
        beta = b_ref[pl.ds(r0, row_tile), :]
    else:
        gamma = w_ref[...]
        beta = b_ref[...]

    # (x - mean) * inv_std * gamma + beta, stored directly in the output dtype.
    o_ref[...] = (d * (inv_std * gamma) + beta).astype(o_ref.dtype)


def adaptive_instance_norm_2d(x, weight, bias, eps=EPS):
    """x: (B, C, H, W); weight, bias: (B*C,) (AdaIN-assigned). Returns (B, C, H, W)."""
    B, C, H, W = x.shape
    BC, HW = B * C, H * W
    assert weight.shape == (BC,) and bias.shape == (BC,), "assign AdaIN weight/bias first"

    x2 = x.reshape(BC, HW)                                  # free reshape, native dtype

    row_tile, params_resident, vmem_limit = _plan(BC, HW, x.dtype)
    grid_rows = pl.cdiv(BC, row_tile)
    bcp = grid_rows * row_tile

    # Params are tiny; pad them so in-kernel slicing of the resident copy (and the
    # streamed tiles) stays in bounds.  x itself is never padded or sliced.
    w2 = jnp.pad(weight.astype(jnp.float32), (0, bcp - BC)).reshape(bcp, 1)
    b2 = jnp.pad(bias.astype(jnp.float32), (0, bcp - BC)).reshape(bcp, 1)

    if params_resident:
        w_spec = pl.BlockSpec((bcp, 1), lambda i: (0, 0))   # fetched once, VMEM-resident
        b_spec = pl.BlockSpec((bcp, 1), lambda i: (0, 0))
    else:
        w_spec = pl.BlockSpec((row_tile, 1), lambda i: (i, 0))
        b_spec = pl.BlockSpec((row_tile, 1), lambda i: (i, 0))

    kernel = functools.partial(adain_kernel, row_tile=row_tile, eps=eps,
                               params_resident=params_resident)
    out = pl.pallas_call(
        kernel,
        out_shape=jax.ShapeDtypeStruct((BC, HW), x.dtype),
        grid=(grid_rows,),
        in_specs=[
            pl.BlockSpec((row_tile, HW), lambda i: (i, 0)),  # lane dim == full HW
            w_spec,
            b_spec,
        ],
        out_specs=pl.BlockSpec((row_tile, HW), lambda i: (i, 0)),
        compiler_params=pltpu.CompilerParams(
            dimension_semantics=("parallel",),
            vmem_limit_bytes=vmem_limit,
        ),
    )(x2, w2, b2)

    return out.reshape(B, C, H, W)


# ----------------------------- numpy reference -------------------------------
def reference_adain(x, weight, bias, eps=EPS):
    x = np.asarray(x, np.float64)
    B, C, H, W = x.shape
    xr = x.reshape(B * C, H * W)
    mu = xr.mean(axis=1, keepdims=True)
    var = xr.var(axis=1, keepdims=True)                     # biased, as batch_norm(training=True)
    out = (xr - mu) / np.sqrt(var + eps)
    out = out * np.asarray(weight, np.float64)[:, None] + np.asarray(bias, np.float64)[:, None]
    return out.reshape(B, C, H, W)


if __name__ == "__main__":
    key = jax.random.PRNGKey(0)
    ks = jax.random.split(key, 12)

    # Case 1: aligned f32 (prompt-scale shapes).
    B, C, H, W = 2, 4, 16, 16
    x = jax.random.normal(ks[0], (B, C, H, W), jnp.float32) * 2.0 + 0.5
    w = jax.random.normal(ks[1], (B * C,), jnp.float32) * 0.5 + 1.0
    b = jax.random.normal(ks[2], (B * C,), jnp.float32) * 0.3
    out = jax.block_until_ready(adaptive_instance_norm_2d(x, w, b))
    assert out.shape == (B, C, H, W) and out.dtype == x.dtype
    np.testing.assert_allclose(np.asarray(out), reference_adain(x, w, b), rtol=1e-4, atol=1e-4)

    # Case 2: unaligned rows and lanes (ragged last row tile, HW not /128).
    B, C, H, W = 2, 5, 5, 19
    x = jax.random.normal(ks[3], (B, C, H, W), jnp.float32) * 3.0 - 1.0
    w = jax.random.normal(ks[4], (B * C,), jnp.float32) + 1.0
    b = jax.random.normal(ks[5], (B * C,), jnp.float32)
    out = jax.block_until_ready(adaptive_instance_norm_2d(x, w, b))
    np.testing.assert_allclose(np.asarray(out), reference_adain(x, w, b), rtol=1e-4, atol=1e-4)

    # Case 3: tiny channel count (single full-extent block path).
    B, C, H, W = 1, 3, 7, 9
    x = jax.random.normal(ks[6], (B, C, H, W), jnp.float32)
    w = jax.random.normal(ks[7], (B * C,), jnp.float32) + 1.0
    b = jax.random.normal(ks[8], (B * C,), jnp.float32)
    out = jax.block_until_ready(adaptive_instance_norm_2d(x, w, b))
    np.testing.assert_allclose(np.asarray(out), reference_adain(x, w, b), rtol=1e-4, atol=1e-4)

    # Case 4: native bf16 activations (bf16 HBM traffic, f32 math in-vreg, 16-row tiles).
    B, C, H, W = 2, 16, 16, 16
    xb = (jax.random.normal(ks[9], (B, C, H, W), jnp.float32) * 2.0).astype(jnp.bfloat16)
    w = jax.random.normal(ks[10], (B * C,), jnp.float32) * 0.5 + 1.0
    b = jax.random.normal(ks[11], (B * C,), jnp.float32) * 0.3
    outb = jax.block_until_ready(adaptive_instance_norm_2d(xb, w, b))
    assert outb.dtype == jnp.bfloat16
    refb = reference_adain(np.asarray(xb.astype(jnp.float32)), w, b)
    np.testing.assert_allclose(np.asarray(outb.astype(jnp.float32)), refb, rtol=2e-2, atol=2e-2)

    print("KERNEL_OK")
</pallas_src>

<mosaic_0001>
module attributes {stable_mosaic.version = 11 : i64} {
  func.func @adain_kernel(%arg0: i32, %arg1: memref<8x256xf32, #tpu.memory_space<vmem>>, %arg2: memref<8x1xf32, #tpu.memory_space<vmem>>, %arg3: memref<8x1xf32, #tpu.memory_space<vmem>>, %arg4: memref<8x256xf32, #tpu.memory_space<vmem>>) attributes {dimension_semantics = [#tpu.dimension_semantics<parallel>], iteration_bounds = array<i64: 1>, scalar_prefetch = 0 : i64, scratch_operands = 0 : i64, tpu.core_type = #tpu.core_type<tc>, window_params = [{transform_indices = @transform_0, window_bounds = array<i64: 8, 256>}, {pipeline_mode = #tpu.pipeline_mode<synchronous>, transform_indices = @transform_1, window_bounds = array<i64: 8, 1>}, {pipeline_mode = #tpu.pipeline_mode<synchronous>, transform_indices = @transform_2, window_bounds = array<i64: 8, 1>}, {transform_indices = @transform_3, window_bounds = array<i64: 8, 256>}]} {
    %c0 = arith.constant 0 : index
    %c0_0 = arith.constant 0 : index
    %0 = vector.load %arg1[%c0, %c0_0] : memref<8x256xf32, #tpu.memory_space<vmem>>, vector<8x256xf32>
    %cst = arith.constant dense<0.000000e+00> : vector<8xf32>
    %1 = vector.multi_reduction <add>, %0, %cst [1] : vector<8x256xf32> to vector<8xf32>
    %2 = vector.shape_cast %1 : vector<8xf32> to vector<8x1xf32>
    %cst_1 = arith.constant 3.906250e-03 : f32
    %3 = vector.broadcast %cst_1 : f32 to vector<8x1xf32>
    %4 = arith.mulf %2, %3 : vector<8x1xf32>
    %5 = vector.broadcast %4 : vector<8x1xf32> to vector<8x256xf32>
    %6 = arith.subf %0, %5 : vector<8x256xf32>
    %7 = arith.mulf %6, %6 : vector<8x256xf32>
    %cst_2 = arith.constant dense<0.000000e+00> : vector<8xf32>
    %8 = vector.multi_reduction <add>, %7, %cst_2 [1] : vector<8x256xf32> to vector<8xf32>
    %9 = vector.shape_cast %8 : vector<8xf32> to vector<8x1xf32>
    %cst_3 = arith.constant 3.906250e-03 : f32
    %10 = vector.broadcast %cst_3 : f32 to vector<8x1xf32>
    %11 = arith.mulf %9, %10 : vector<8x1xf32>
    %cst_4 = arith.constant 9.99999974E-6 : f32
    %12 = vector.broadcast %cst_4 : f32 to vector<8x1xf32>
    %13 = arith.addf %11, %12 : vector<8x1xf32>
    %14 = math.rsqrt %13 : vector<8x1xf32>
    %c8_i32 = arith.constant 8 : i32
    %15 = arith.muli %arg0, %c8_i32 : i32
    %16 = tpu.assume_multiple %15, 8 : i32
    %17 = arith.index_cast %16 : i32 to index
    %c0_5 = arith.constant 0 : index
    %18 = vector.load %arg2[%17, %c0_5] : memref<8x1xf32, #tpu.memory_space<vmem>>, vector<8x1xf32>
    %19 = arith.index_cast %16 : i32 to index
    %c0_6 = arith.constant 0 : index
    %20 = vector.load %arg3[%19, %c0_6] : memref<8x1xf32, #tpu.memory_space<vmem>>, vector<8x1xf32>
    %21 = arith.mulf %14, %18 : vector<8x1xf32>
    %22 = vector.broadcast %21 : vector<8x1xf32> to vector<8x256xf32>
    %23 = arith.mulf %6, %22 : vector<8x256xf32>
    %24 = vector.broadcast %20 : vector<8x1xf32> to vector<8x256xf32>
    %25 = arith.addf %23, %24 : vector<8x256xf32>
    %c0_7 = arith.constant 0 : index
    %c0_8 = arith.constant 0 : index
    %26 = vector.load %arg4[%c0_7, %c0_8] : memref<8x256xf32, #tpu.memory_space<vmem>>, vector<8x256xf32>
    tpu.vector_store %arg4[%c0_7, %c0_8], %25 {strides = array<i32>} : memref<8x256xf32, #tpu.memory_space<vmem>>, vector<8x256xf32>,
    return
  }
  func.func @transform_0(%arg0: i32) -> (i32, i32) {
    %c0_i32 = arith.constant 0 : i32
    %c0_i32_0 = arith.constant 0 : i32
    return %arg0, %c0_i32 : i32, i32
  }
  func.func @transform_1(%arg0: i32) -> (i32, i32) {
    %c0_i32 = arith.constant 0 : i32
    %c0_i32_0 = arith.constant 0 : i32
    %c0_i32_1 = arith.constant 0 : i32
    return %c0_i32, %c0_i32_0 : i32, i32
  }
  func.func @transform_2(%arg0: i32) -> (i32, i32) {
    %c0_i32 = arith.constant 0 : i32
    %c0_i32_0 = arith.constant 0 : i32
    %c0_i32_1 = arith.constant 0 : i32
    return %c0_i32, %c0_i32_0 : i32, i32
  }
  func.func @transform_3(%arg0: i32) -> (i32, i32) {
    %c0_i32 = arith.constant 0 : i32
    %c0_i32_0 = arith.constant 0 : i32
    return %arg0, %c0_i32 : i32, i32
  }
}

</mosaic_0001>

<llo_original>
// kernel: tpu_custom_call.1
$region0: #{tpu_custom_call.1}
  #allocation0 [shape = 'u32[]', space=smem, size = 0x4, offset = 0x4, fixed_abs, tag = 'smem constant byte address 0x4 - core index']
  #allocation1 [shape = 'u32[144,128]{1,0:T(1,128)}', space=vmem, size = 0x12000, scoped, tag = 'internal scratch']
  %s0 = inlined_call_operand.vmem [shape: f32[8,256], index: 0, kind: input, shape index: {}]
  %s1 = inlined_call_operand.vmem [shape: f32[8,1], index: 1, kind: input, shape index: {}]
  %s2 = inlined_call_operand.vmem [shape: f32[8,1], index: 2, kind: input, shape index: {}]
  %s3 = inlined_call_operand.hbm [shape: f32[8,256], index: 3, kind: output, shape index: {}]
  %s4 = sld [smem:[#allocation0]]
  $region22: #{tpu_custom_call.1} parent=0
    _
  %s6 = ssub.s32 1, %s4
  %s7 = scalar_select 0, %s6, %s4
  $region1: #{tpu_custom_call.1} parent=0
    #allocation2 [shape = 'u8[8192]{0}', space=vmem, size = 0x2000, scoped, tag = 'output window, operand 0, single buffered']
    #allocation3 [shape = 's32[1]{0}', space=sflag, size = 0x4, scoped, tag = 'scoped memory for tpu_custom_call.1']
    %8 = vsyncpa [#allocation3], 0
    // Predicated region
    $region2: #{tpu_custom_call.1} parent=1 // pred_check
      _
    $region3: #{tpu_custom_call.1} parent=1 // pred_check_branch
      %10 = sbr.rel (0) target = $region5
    $region4: #{tpu_custom_call.1} parent=1 // pred_region
      _
    $region5: #{tpu_custom_call.1} parent=1 // pred_fallthru
      _
    // Predicated region
    $region6: #{tpu_custom_call.1} parent=1 // pred_check
      _
    $region7: #{tpu_custom_call.1} parent=1 // pred_check_branch
      %12 = sbr.rel (0) target = $region9
    $region8: #{tpu_custom_call.1} parent=1 // pred_region
      _
    $region9: #{tpu_custom_call.1} parent=1 // pred_fallthru
      _
    // Predicated region
    $region10: #{tpu_custom_call.1} parent=1 // pred_check
      _
    $region11: #{tpu_custom_call.1} parent=1 // pred_check_branch
      %14 = sbr.rel (0) target = $region13
    $region12: #{tpu_custom_call.1} parent=1 // pred_region
      _
    $region13: #{tpu_custom_call.1} parent=1 // pred_fallthru
      _
    %v15 = vld [vmem:[%s0] sm:$0xff]
    %v16 = vld [vmem:[%s0 + $0x8] sm:$0xff]
    %v17 = vadd.f32 %v15, %v16
    %18 = vadd.xlane.f32.xlu0 %v17
    %v19 = vpop.xlane.xlu0 %18
    %v20 = vmul.f32 %v19, 0.00390625
    %v21 = vsub.f32 %v15, %v20
    %v22 = vsub.f32 %v16, %v20
    %v23 = vmul.f32 %v21, %v21
    %v24 = vmul.f32 %v22, %v22
    %v25 = vadd.f32 %v23, %v24
    %26 = vadd.xlane.f32.xlu0 %v25
    %v27 = vpop.xlane.xlu0 %26
    %v28 = vmul.f32 %v27, 0.00390625
    %v29 = vadd.f32 %v28, 1e-05
    %v30 = vrsqrt.pop %v29
    %s31 = smul.u32 0, 8
    %s32 = scalar_lea.vmem %s1, %s31
    %v33 = vld [vmem:[%s32] sm:$0xff]
    %s34 = scalar_lea.vmem %s2, %s31
    %v35 = vld [vmem:[%s34] sm:$0xff]
    %v36 = vmul.f32 %v30, %v33
    %38 = vset.pattern.permute.xlu0 0
    %39 = vperm.xlu0 %38, %v36
    %v40 = vpop.permute.xlu0 %39
    %v42 = vmul.f32 %v21, %v40
    %v43 = vmul.f32 %v22, %v40
    %45 = vset.pattern.permute.xlu0 0
    %46 = vperm.xlu0 %45, %v35
    %v47 = vpop.permute.xlu0 %46
    %v49 = vadd.f32 %v42, %v47
    %v50 = vadd.f32 %v43, %v47
    %51 = vst [vmem:[#allocation2] sm:$0xff] %v49
    %52 = vst [vmem:[#allocation2 + $0x8] sm:$0xff] %v50
    // Predicated region
    $region14: #{tpu_custom_call.1} parent=1 // pred_check
      _
    $region15: #{tpu_custom_call.1} parent=1 // pred_check_branch
      %54 = sbr.rel (0) target = $region17
    $region16: #{tpu_custom_call.1} parent=1 // pred_region
      %s56 = ssub.s32 256, 256
      %57 = vsyncadd [#allocation3], %s56
      %s59 = sshll.u32 [#allocation2], 4
      %s60 = int_to_ptr.vmem [resolvable:$true] %s59
      %62 = dma.vmem_to_hbm [thread:$0]  %s60, 256, %s3, [#allocation3]
    $region17: #{tpu_custom_call.1} parent=1 // pred_fallthru
      _
    // Predicated region
    $region18: #{tpu_custom_call.1} parent=1 // pred_check
      _
    $region19: #{tpu_custom_call.1} parent=1 // pred_check_branch
      %64 = sbr.rel (0) target = $region21
    $region20: #{tpu_custom_call.1} parent=1 // pred_region
      %65 = dma.done [#allocation3], 256
    $region21: #{tpu_custom_call.1} parent=1 // pred_fallthru
      _
    %66 = vsyncpa [#allocation3], 1

</llo_original>
